<compile_context>
chip_gen: v6e
topology: v6e:2x2x1
jax: 0.10.0
libtpu: 0.0.40
codegen_flags: <defaults>
</compile_context>

<pallas_src>
import jax
import jax.numpy as jnp
from jax.experimental import pallas as pl
from jax.experimental.pallas import tpu as pltpu


def se_block_kernel(x_ref, w1_ref, b1_ref, w2_ref, b2_ref, o_ref):
    # x_ref:  (TB, C, HW)   batch tile
    # w1_ref: (hidden, C)   fc1.weight
    # b1_ref: (1, hidden)   fc1.bias (lane-dense row)
    # w2_ref: (C, hidden)   fc2.weight
    # b2_ref: (1, C)        fc2.bias (lane-dense row)
    # o_ref:  (TB, C, HW)
    x = x_ref[...]
    xf = x if x.dtype == jnp.float32 else x.astype(jnp.float32)  # hoist cast

    # squeeze: global average pool over spatial dims -> (TB, C)
    sq = jnp.mean(xf, axis=-1)

    # excitation, batched over the tile.  hidden and C are tiny, so use
    # VPU broadcast-multiply + lane reduction instead of padded MXU passes.
    # fc1: h[b, j] = sum_c sq[b, c] * w1[j, c] + b1[j]
    h = jnp.sum(sq[:, None, :] * w1_ref[...][None, :, :], axis=-1) + b1_ref[...]
    h = jnp.maximum(h, 0.0)                                      # (TB, hidden)
    # fc2: e[b, c] = sum_j h[b, j] * w2[c, j] + b2[c]
    e = jnp.sum(h[:, None, :] * w2_ref[...][None, :, :], axis=-1) + b2_ref[...]
    e = jax.nn.sigmoid(e)                                        # (TB, C)

    # scale: broadcast the per-channel gate over the (lane-dense) spatial dims
    o_ref[...] = (xf * e[:, :, None]).astype(o_ref.dtype)


def _choose_batch_tile(B, per_elem_bytes, target_block_bytes=4 << 20):
    """Largest divisor of B whose block is <= target_block_bytes (>= 1)."""
    tb = max(1, min(B, target_block_bytes // max(per_elem_bytes, 1)))
    while B % tb != 0:
        tb -= 1
    # Prefer >= 2 grid steps (v7x has 2 TensorCores) if blocks stay >= ~1 MiB.
    if B // tb < 2 and B > 1 and per_elem_bytes * (B // 2) >= (1 << 20):
        tb = max(1, B // 2)
        while B % tb != 0:
            tb -= 1
    return tb


def se_block(x, fc1_w, fc1_b, fc2_w, fc2_b):
    """x: (B, C, H, W).  Returns (B, C, H, W). Matches PyTorch SEBlock.forward."""
    B, C, H, W = x.shape
    hidden = fc1_w.shape[0]
    HW = H * W

    x_flat = x.reshape(B, C, HW)
    b1_row = fc1_b.reshape(1, hidden)
    b2_row = fc2_b.reshape(1, C)

    per_elem_bytes = C * HW * jnp.dtype(x.dtype).itemsize
    tb = _choose_batch_tile(B, per_elem_bytes)
    grid = (B // tb,)

    out_flat = pl.pallas_call(
        se_block_kernel,
        out_shape=jax.ShapeDtypeStruct((B, C, HW), x.dtype),
        grid_spec=pltpu.PrefetchScalarGridSpec(
            num_scalar_prefetch=0,
            grid=grid,
            in_specs=[
                pl.BlockSpec((tb, C, HW), lambda b: (b, 0, 0)),
                pl.BlockSpec((hidden, C), lambda b: (0, 0)),
                pl.BlockSpec((1, hidden), lambda b: (0, 0)),
                pl.BlockSpec((C, hidden), lambda b: (0, 0)),
                pl.BlockSpec((1, C), lambda b: (0, 0)),
            ],
            out_specs=pl.BlockSpec((tb, C, HW), lambda b: (b, 0, 0)),
        ),
        compiler_params=pltpu.CompilerParams(
            dimension_semantics=("parallel",),
            # Raise v5e's 16 MiB scoped-VMEM default; 32 MiB is safe on all gens
            # (v7x physical VMEM is 64 MiB) and comfortably holds the
            # double-buffered ~4 MiB in/out blocks plus the tiny weights.
            vmem_limit_bytes=32 << 20,
        ),
    )(x_flat, fc1_w, b1_row, fc2_w, b2_row)

    return out_flat.reshape(B, C, H, W)


def se_block_reference(x, fc1_w, fc1_b, fc2_w, fc2_b):
    sq = jnp.mean(x, axis=(2, 3))                      # (B, C)
    h = jnp.maximum(sq @ fc1_w.T + fc1_b, 0.0)         # (B, hidden)
    e = jax.nn.sigmoid(h @ fc2_w.T + fc2_b)            # (B, C)
    return x * e[:, :, None, None]


if __name__ == "__main__":
    B, C, H, W = 2, 32, 16, 16
    reduction_ratio = 16
    hidden = C // reduction_ratio  # = 2

    key = jax.random.PRNGKey(0)
    kx, k1, k2, k3, k4 = jax.random.split(key, 5)

    x = jax.random.normal(kx, (B, C, H, W), dtype=jnp.float32)
    # nn.Linear shapes: weight = (out, in), bias = (out,)
    fc1_w = jax.random.normal(k1, (hidden, C), dtype=jnp.float32) * 0.1
    fc1_b = jax.random.normal(k2, (hidden,), dtype=jnp.float32) * 0.1
    fc2_w = jax.random.normal(k3, (C, hidden), dtype=jnp.float32) * 0.1
    fc2_b = jax.random.normal(k4, (C,), dtype=jnp.float32) * 0.1

    out = se_block(x, fc1_w, fc1_b, fc2_w, fc2_b)
    out = jax.block_until_ready(out)

    ref = se_block_reference(x, fc1_w, fc1_b, fc2_w, fc2_b)
    assert out.shape == (B, C, H, W)
    assert jnp.allclose(out, ref, atol=1e-5, rtol=1e-5), "mismatch vs reference"

    print("KERNEL_OK")
</pallas_src>

<mosaic_0001>
module attributes {stable_mosaic.version = 11 : i64} {
  func.func @se_block_kernel(%arg0: i32, %arg1: memref<2x32x256xf32, #tpu.memory_space<vmem>>, %arg2: memref<2x32xf32, #tpu.memory_space<vmem>>, %arg3: memref<1x2xf32, #tpu.memory_space<vmem>>, %arg4: memref<32x2xf32, #tpu.memory_space<vmem>>, %arg5: memref<1x32xf32, #tpu.memory_space<vmem>>, %arg6: memref<2x32x256xf32, #tpu.memory_space<vmem>>) attributes {dimension_semantics = [#tpu.dimension_semantics<parallel>], iteration_bounds = array<i64: 1>, scalar_prefetch = 0 : i64, scratch_operands = 0 : i64, tpu.core_type = #tpu.core_type<tc>, window_params = [{transform_indices = @transform_0, window_bounds = array<i64: 2, 32, 256>}, {pipeline_mode = #tpu.pipeline_mode<synchronous>, transform_indices = @transform_1, window_bounds = array<i64: 2, 32>}, {pipeline_mode = #tpu.pipeline_mode<synchronous>, transform_indices = @transform_2, window_bounds = array<i64: 1, 2>}, {pipeline_mode = #tpu.pipeline_mode<synchronous>, transform_indices = @transform_3, window_bounds = array<i64: 32, 2>}, {pipeline_mode = #tpu.pipeline_mode<synchronous>, transform_indices = @transform_4, window_bounds = array<i64: 1, 32>}, {transform_indices = @transform_5, window_bounds = array<i64: 2, 32, 256>}]} {
    %c0 = arith.constant 0 : index
    %c0_0 = arith.constant 0 : index
    %c0_1 = arith.constant 0 : index
    %0 = vector.load %arg1[%c0, %c0_0, %c0_1] : memref<2x32x256xf32, #tpu.memory_space<vmem>>, vector<2x32x256xf32>
    %cst = arith.constant dense<0.000000e+00> : vector<2x32xf32>
    %1 = vector.multi_reduction <add>, %0, %cst [2] : vector<2x32x256xf32> to vector<2x32xf32>
    %cst_2 = arith.constant 2.560000e+02 : f32
    %2 = vector.broadcast %cst_2 : f32 to vector<2x32xf32>
    %3 = arith.divf %1, %2 : vector<2x32xf32>
    %4 = vector.shape_cast %3 : vector<2x32xf32> to vector<2x1x32xf32>
    %c0_3 = arith.constant 0 : index
    %c0_4 = arith.constant 0 : index
    %5 = vector.load %arg2[%c0_3, %c0_4] : memref<2x32xf32, #tpu.memory_space<vmem>>, vector<2x32xf32>
    %6 = vector.shape_cast %5 : vector<2x32xf32> to vector<1x2x32xf32>
    %7 = vector.broadcast %4 : vector<2x1x32xf32> to vector<2x2x32xf32>
    %8 = vector.broadcast %6 : vector<1x2x32xf32> to vector<2x2x32xf32>
    %9 = arith.mulf %7, %8 : vector<2x2x32xf32>
    %cst_5 = arith.constant dense<0.000000e+00> : vector<2x2xf32>
    %10 = vector.multi_reduction <add>, %9, %cst_5 [2] : vector<2x2x32xf32> to vector<2x2xf32>
    %c0_6 = arith.constant 0 : index
    %c0_7 = arith.constant 0 : index
    %11 = vector.load %arg3[%c0_6, %c0_7] : memref<1x2xf32, #tpu.memory_space<vmem>>, vector<1x2xf32>
    %12 = vector.broadcast %11 : vector<1x2xf32> to vector<2x2xf32>
    %13 = arith.addf %10, %12 : vector<2x2xf32>
    %cst_8 = arith.constant 0.000000e+00 : f32
    %14 = vector.broadcast %cst_8 : f32 to vector<2x2xf32>
    %15 = arith.maximumf %13, %14 : vector<2x2xf32>
    %16 = vector.shape_cast %15 : vector<2x2xf32> to vector<2x1x2xf32>
    %c0_9 = arith.constant 0 : index
    %c0_10 = arith.constant 0 : index
    %17 = vector.load %arg4[%c0_9, %c0_10] : memref<32x2xf32, #tpu.memory_space<vmem>>, vector<32x2xf32>
    %18 = vector.shape_cast %17 : vector<32x2xf32> to vector<1x32x2xf32>
    %19 = vector.broadcast %16 : vector<2x1x2xf32> to vector<2x32x2xf32>
    %20 = vector.broadcast %18 : vector<1x32x2xf32> to vector<2x32x2xf32>
    %21 = arith.mulf %19, %20 : vector<2x32x2xf32>
    %cst_11 = arith.constant dense<0.000000e+00> : vector<2x32xf32>
    %22 = vector.multi_reduction <add>, %21, %cst_11 [2] : vector<2x32x2xf32> to vector<2x32xf32>
    %c0_12 = arith.constant 0 : index
    %c0_13 = arith.constant 0 : index
    %23 = vector.load %arg5[%c0_12, %c0_13] : memref<1x32xf32, #tpu.memory_space<vmem>>, vector<1x32xf32>
    %24 = vector.broadcast %23 : vector<1x32xf32> to vector<2x32xf32>
    %25 = arith.addf %22, %24 : vector<2x32xf32>
    %26 = arith.negf %25 : vector<2x32xf32>
    %27 = math.exp %26 : vector<2x32xf32>
    %cst_14 = arith.constant 1.000000e+00 : f32
    %28 = vector.broadcast %cst_14 : f32 to vector<2x32xf32>
    %29 = arith.addf %28, %27 : vector<2x32xf32>
    %30 = arith.divf %28, %29 : vector<2x32xf32>
    %31 = vector.shape_cast %30 : vector<2x32xf32> to vector<2x32x1xf32>
    %32 = vector.broadcast %31 : vector<2x32x1xf32> to vector<2x32x256xf32>
    %33 = arith.mulf %0, %32 : vector<2x32x256xf32>
    %c0_15 = arith.constant 0 : index
    %c0_16 = arith.constant 0 : index
    %c0_17 = arith.constant 0 : index
    %34 = vector.load %arg6[%c0_15, %c0_16, %c0_17] : memref<2x32x256xf32, #tpu.memory_space<vmem>>, vector<2x32x256xf32>
    tpu.vector_store %arg6[%c0_15, %c0_16, %c0_17], %33 {strides = array<i32>} : memref<2x32x256xf32, #tpu.memory_space<vmem>>, vector<2x32x256xf32>,
    return
  }
  func.func @transform_0(%arg0: i32) -> (i32, i32, i32) {
    %c0_i32 = arith.constant 0 : i32
    %c0_i32_0 = arith.constant 0 : i32
    %c0_i32_1 = arith.constant 0 : i32
    return %arg0, %c0_i32, %c0_i32_0 : i32, i32, i32
  }
  func.func @transform_1(%arg0: i32) -> (i32, i32) {
    %c0_i32 = arith.constant 0 : i32
    %c0_i32_0 = arith.constant 0 : i32
    %c0_i32_1 = arith.constant 0 : i32
    return %c0_i32, %c0_i32_0 : i32, i32
  }
  func.func @transform_2(%arg0: i32) -> (i32, i32) {
    %c0_i32 = arith.constant 0 : i32
    %c0_i32_0 = arith.constant 0 : i32
    %c0_i32_1 = arith.constant 0 : i32
    return %c0_i32, %c0_i32_0 : i32, i32
  }
  func.func @transform_3(%arg0: i32) -> (i32, i32) {
    %c0_i32 = arith.constant 0 : i32
    %c0_i32_0 = arith.constant 0 : i32
    %c0_i32_1 = arith.constant 0 : i32
    return %c0_i32, %c0_i32_0 : i32, i32
  }
  func.func @transform_4(%arg0: i32) -> (i32, i32) {
    %c0_i32 = arith.constant 0 : i32
    %c0_i32_0 = arith.constant 0 : i32
    %c0_i32_1 = arith.constant 0 : i32
    return %c0_i32, %c0_i32_0 : i32, i32
  }
  func.func @transform_5(%arg0: i32) -> (i32, i32, i32) {
    %c0_i32 = arith.constant 0 : i32
    %c0_i32_0 = arith.constant 0 : i32
    %c0_i32_1 = arith.constant 0 : i32
    return %arg0, %c0_i32, %c0_i32_0 : i32, i32, i32
  }
}

</mosaic_0001>

<llo_original>
// kernel: tpu_custom_call.1
$region0: #{tpu_custom_call.1}
  #allocation0 [shape = 'u32[]', space=smem, size = 0x4, offset = 0x4, fixed_abs, tag = 'smem constant byte address 0x4 - core index']
  #allocation1 [shape = 'u32[144,128]{1,0:T(1,128)}', space=vmem, size = 0x12000, scoped, tag = 'internal scratch']
  %s0 = inlined_call_operand.hbm [shape: f32[2,32,256], index: 0, kind: input, shape index: {}]
  %s1 = inlined_call_operand.vmem [shape: f32[2,32], index: 1, kind: input, shape index: {}]
  %s2 = inlined_call_operand.vmem [shape: f32[1,2], index: 2, kind: input, shape index: {}]
  %s3 = inlined_call_operand.vmem [shape: f32[32,2], index: 3, kind: input, shape index: {}]
  %s4 = inlined_call_operand.vmem [shape: f32[1,32], index: 4, kind: input, shape index: {}]
  %s5 = inlined_call_operand.hbm [shape: f32[2,32,256], index: 5, kind: output, shape index: {}]
  %s6 = sld [smem:[#allocation0]]
  $region34: #{tpu_custom_call.1} parent=0
    _
  %s8 = ssub.s32 1, %s6
  %s9 = scalar_select 0, %s8, %s6
  $region1: #{tpu_custom_call.1} parent=0
    #allocation2 [shape = 'u8[65536]{0}', space=vmem, size = 0x10000, scoped, tag = 'input window, operand 0, single buffered']
    #allocation3 [shape = 's32[1]{0}', space=sflag, size = 0x4, scoped, tag = 'scoped memory for tpu_custom_call.1']
    #allocation4 [shape = 's32[1]{0}', space=sflag, size = 0x4, scoped, tag = 'scoped memory for tpu_custom_call.1']
    #allocation5 [shape = 'u8[65536]{0}', space=vmem, size = 0x10000, scoped, tag = 'output window, operand 0, single buffered']
    %10 = vsyncpa [#allocation3], 0
    %11 = vsyncpa [#allocation4], 0
    // Predicated region
    $region2: #{tpu_custom_call.1} parent=1 // pred_check
      _
    $region3: #{tpu_custom_call.1} parent=1 // pred_check_branch
      %13 = sbr.rel (0) target = $region5
    $region4: #{tpu_custom_call.1} parent=1 // pred_region
      %s15 = ssub.s32 2048, 2048
      %16 = vsyncadd [#allocation3], %s15
      %s17 = sshll.u32 [#allocation2], 4
      %s18 = int_to_ptr.vmem [resolvable:$true] %s17
      %23 = dma.hbm_to_vmem [thread:$0]  %s0, 2048, %s18, [#allocation3], 256, 256, 16
    $region5: #{tpu_custom_call.1} parent=1 // pred_fallthru
      _
    // Predicated region
    $region6: #{tpu_custom_call.1} parent=1 // pred_check
      _
    $region7: #{tpu_custom_call.1} parent=1 // pred_check_branch
      %25 = sbr.rel (0) target = $region9
    $region8: #{tpu_custom_call.1} parent=1 // pred_region
      _
    $region9: #{tpu_custom_call.1} parent=1 // pred_fallthru
      _
    // Predicated region
    $region10: #{tpu_custom_call.1} parent=1 // pred_check
      _
    $region11: #{tpu_custom_call.1} parent=1 // pred_check_branch
      %27 = sbr.rel (0) target = $region13
    $region12: #{tpu_custom_call.1} parent=1 // pred_region
      _
    $region13: #{tpu_custom_call.1} parent=1 // pred_fallthru
      _
    // Predicated region
    $region14: #{tpu_custom_call.1} parent=1 // pred_check
      _
    $region15: #{tpu_custom_call.1} parent=1 // pred_check_branch
      %29 = sbr.rel (0) target = $region17
    $region16: #{tpu_custom_call.1} parent=1 // pred_region
      _
    $region17: #{tpu_custom_call.1} parent=1 // pred_fallthru
      _
    // Predicated region
    $region18: #{tpu_custom_call.1} parent=1 // pred_check
      _
    $region19: #{tpu_custom_call.1} parent=1 // pred_check_branch
      %31 = sbr.rel (0) target = $region21
    $region20: #{tpu_custom_call.1} parent=1 // pred_region
      _
    $region21: #{tpu_custom_call.1} parent=1 // pred_fallthru
      _
    // Predicated region
    $region22: #{tpu_custom_call.1} parent=1 // pred_check
      _
    $region23: #{tpu_custom_call.1} parent=1 // pred_check_branch
      %33 = sbr.rel (0) target = $region25
    $region24: #{tpu_custom_call.1} parent=1 // pred_region
      %34 = dma.done [#allocation3], 2048
    $region25: #{tpu_custom_call.1} parent=1 // pred_fallthru
      _
    %v35 = vld [vmem:[#allocation2] sm:$0xff]
    %v36 = vld [vmem:[#allocation2 + $0x8] sm:$0xff]
    %v37 = vld [vmem:[#allocation2 + $0x10] sm:$0xff]
    %v38 = vld [vmem:[#allocation2 + $0x18] sm:$0xff]
    %v39 = vld [vmem:[#allocation2 + $0x20] sm:$0xff]
    %v40 = vld [vmem:[#allocation2 + $0x28] sm:$0xff]
    %v41 = vld [vmem:[#allocation2 + $0x30] sm:$0xff]
    %v42 = vld [vmem:[#allocation2 + $0x38] sm:$0xff]
    %v43 = vld [vmem:[#allocation2 + $0x40] sm:$0xff]
    %v44 = vld [vmem:[#allocation2 + $0x48] sm:$0xff]
    %v45 = vld [vmem:[#allocation2 + $0x50] sm:$0xff]
    %v46 = vld [vmem:[#allocation2 + $0x58] sm:$0xff]
    %v47 = vld [vmem:[#allocation2 + $0x60] sm:$0xff]
    %v48 = vld [vmem:[#allocation2 + $0x68] sm:$0xff]
    %v49 = vld [vmem:[#allocation2 + $0x70] sm:$0xff]
    %v50 = vld [vmem:[#allocation2 + $0x78] sm:$0xff]
    %v51 = vadd.f32 %v35, %v36
    %52 = vadd.xlane.f32.xlu0 %v51
    %v53 = vpop.xlane.xlu0 %52
    %v54 = vadd.f32 %v37, %v38
    %55 = vadd.xlane.f32.xlu0 %v54
    %v56 = vpop.xlane.xlu0 %55
    %v57 = vadd.f32 %v39, %v40
    %58 = vadd.xlane.f32.xlu0 %v57
    %v59 = vpop.xlane.xlu0 %58
    %v60 = vadd.f32 %v41, %v42
    %61 = vadd.xlane.f32.xlu0 %v60
    %v62 = vpop.xlane.xlu0 %61
    %v63 = vadd.f32 %v43, %v44
    %64 = vadd.xlane.f32.xlu0 %v63
    %v65 = vpop.xlane.xlu0 %64
    %v66 = vadd.f32 %v45, %v46
    %67 = vadd.xlane.f32.xlu0 %v66
    %v68 = vpop.xlane.xlu0 %67
    %v69 = vadd.f32 %v47, %v48
    %70 = vadd.xlane.f32.xlu0 %v69
    %v71 = vpop.xlane.xlu0 %70
    %v72 = vadd.f32 %v49, %v50
    %73 = vadd.xlane.f32.xlu0 %v72
    %v74 = vpop.xlane.xlu0 %73
    %v75 = vrcp.pop 256.0
    %v76 = vmul.f32 %v53, %v75
    %v77 = vmul.f32 %v56, %v75
    %v78 = vmul.f32 %v59, %v75
    %v79 = vmul.f32 %v62, %v75
    %v80 = vmul.f32 %v65, %v75
    %v81 = vmul.f32 %v68, %v75
    %v82 = vmul.f32 %v71, %v75
    %v83 = vmul.f32 %v74, %v75
    %v84 = vld [vmem:[%s1] sm:$0x3]
    %v86 = vlaneseq
    %v87 = vshrl.u32 %v86, 7
    %v88 = vsub.s32 0, %v87
    %v89 = vrot.slane %v84, %v88
    %91 = vbcast.lane.b32.xlu0 %v89, 256
    %v92 = vpop.permute.xlu0 %91
    %s94 = sor.u32 256, 8
    %95 = vbcast.lane.b32.xlu0 %v89, %s94
    %v96 = vpop.permute.xlu0 %95
    %s98 = sor.u32 256, 16
    %99 = vbcast.lane.b32.xlu0 %v89, %s98
    %v100 = vpop.permute.xlu0 %99
    %s102 = sor.u32 256, 24
    %103 = vbcast.lane.b32.xlu0 %v89, %s102
    %v104 = vpop.permute.xlu0 %103
    %v105 = vlaneseq
    %v106 = vshrl.u32 %v105, 7
    %v107 = vsub.s32 1, %v106
    %v108 = vrot.slane %v84, %v107
    %110 = vbcast.lane.b32.xlu0 %v108, 256
    %v111 = vpop.permute.xlu0 %110
    %s113 = sor.u32 256, 8
    %114 = vbcast.lane.b32.xlu0 %v108, %s113
    %v115 = vpop.permute.xlu0 %114
    %s117 = sor.u32 256, 16
    %118 = vbcast.lane.b32.xlu0 %v108, %s117
    %v119 = vpop.permute.xlu0 %118
    %s121 = sor.u32 256, 24
    %122 = vbcast.lane.b32.xlu0 %v108, %s121
    %v123 = vpop.permute.xlu0 %122
    %v132 = vmul.f32 %v76, %v92
    %v133 = vmul.f32 %v77, %v96
    %v134 = vmul.f32 %v78, %v100
    %v135 = vmul.f32 %v79, %v104
    %v136 = vmul.f32 %v76, %v111
    %v137 = vmul.f32 %v77, %v115
    %v138 = vmul.f32 %v78, %v119
    %v139 = vmul.f32 %v79, %v123
    %v140 = vmul.f32 %v80, %v92
    %v141 = vmul.f32 %v81, %v96
    %v142 = vmul.f32 %v82, %v100
    %v143 = vmul.f32 %v83, %v104
    %v144 = vmul.f32 %v80, %v111
    %v145 = vmul.f32 %v81, %v115
    %v146 = vmul.f32 %v82, %v119
    %v147 = vmul.f32 %v83, %v123
    %164 = vset.pattern.permute.xlu0 0
    %165 = vperm.xlu0 %164, %v132
    %v166 = vpop.permute.xlu0 %165
    %167 = vset.pattern.permute.xlu0 0
    %168 = vperm.xlu0 %167, %v133
    %v169 = vpop.permute.xlu0 %168
    %170 = vset.pattern.permute.xlu0 0
    %171 = vperm.xlu0 %170, %v134
    %v172 = vpop.permute.xlu0 %171
    %173 = vset.pattern.permute.xlu0 0
    %174 = vperm.xlu0 %173, %v135
    %v175 = vpop.permute.xlu0 %174
    %176 = vset.pattern.permute.xlu0 0
    %177 = vperm.xlu0 %176, %v136
    %v178 = vpop.permute.xlu0 %177
    %179 = vset.pattern.permute.xlu0 0
    %180 = vperm.xlu0 %179, %v137
    %v181 = vpop.permute.xlu0 %180
    %182 = vset.pattern.permute.xlu0 0
    %183 = vperm.xlu0 %182, %v138
    %v184 = vpop.permute.xlu0 %183
    %185 = vset.pattern.permute.xlu0 0
    %186 = vperm.xlu0 %185, %v139
    %v187 = vpop.permute.xlu0 %186
    %188 = vset.pattern.permute.xlu0 0
    %189 = vperm.xlu0 %188, %v140
    %v190 = vpop.permute.xlu0 %189
    %191 = vset.pattern.permute.xlu0 0
    %192 = vperm.xlu0 %191, %v141
    %v193 = vpop.permute.xlu0 %192
    %194 = vset.pattern.permute.xlu0 0
    %195 = vperm.xlu0 %194, %v142
    %v196 = vpop.permute.xlu0 %195
    %197 = vset.pattern.permute.xlu0 0
    %198 = vperm.xlu0 %197, %v143
    %v199 = vpop.permute.xlu0 %198
    %200 = vset.pattern.permute.xlu0 0
    %201 = vperm.xlu0 %200, %v144
    %v202 = vpop.permute.xlu0 %201
    %203 = vset.pattern.permute.xlu0 0
    %204 = vperm.xlu0 %203, %v145
    %v205 = vpop.permute.xlu0 %204
    %206 = vset.pattern.permute.xlu0 0
    %207 = vperm.xlu0 %206, %v146
    %v208 = vpop.permute.xlu0 %207
    %209 = vset.pattern.permute.xlu0 0
    %210 = vperm.xlu0 %209, %v147
    %v211 = vpop.permute.xlu0 %210
    %v212 = vlaneseq
    %v213 = vand.u32 %v212, 127
    %v214 = vlaneseq
    %v215 = vshrl.u32 %v214, 7
    %v216 = vsub.s32 %v213, %v215
    %v217 = vrot.slane %v166, %v216
    %v218 = vadd.s32 %v213, 4294967288
    %v219 = vlaneseq
    %v220 = vshrl.u32 %v219, 7
    %v221 = vsub.s32 %v218, %v220
    %v222 = vrot.slane %v169, %v221
    %vm223 = vcmask 130112
    %v224 = vsel %vm223, %v222, %v217
    %v225 = vadd.s32 %v213, 4294967280
    %v226 = vlaneseq
    %v227 = vshrl.u32 %v226, 7
    %v228 = vsub.s32 %v225, %v227
    %v229 = vrot.slane %v172, %v228
    %vm230 = vcmask 195712
    %v231 = vsel %vm230, %v229, %v224
    %v232 = vadd.s32 %v213, 4294967272
    %v233 = vlaneseq
    %v234 = vshrl.u32 %v233, 7
    %v235 = vsub.s32 %v232, %v234
    %v236 = vrot.slane %v175, %v235
    %vm237 = vcmask 261312
    %v238 = vsel %vm237, %v236, %v231
    %v239 = vlaneseq
    %v240 = vshrl.u32 %v239, 7
    %v241 = vsub.s32 %v213, %v240
    %v242 = vrot.slane %v178, %v241
    %v243 = vlaneseq
    %v244 = vshrl.u32 %v243, 7
    %v245 = vsub.s32 %v218, %v244
    %v246 = vrot.slane %v181, %v245
    %v247 = vsel %vm223, %v246, %v242
    %v248 = vlaneseq
    %v249 = vshrl.u32 %v248, 7
    %v250 = vsub.s32 %v225, %v249
    %v251 = vrot.slane %v184, %v250
    %v252 = vsel %vm230, %v251, %v247
    %v253 = vlaneseq
    %v254 = vshrl.u32 %v253, 7
    %v255 = vsub.s32 %v232, %v254
    %v256 = vrot.slane %v187, %v255
    %v257 = vsel %vm237, %v256, %v252
    %v258 = vlaneseq
    %v259 = vshrl.u32 %v258, 7
    %v260 = vsub.s32 %v213, %v259
    %v261 = vrot.slane %v190, %v260
    %v262 = vlaneseq
    %v263 = vshrl.u32 %v262, 7
    %v264 = vsub.s32 %v218, %v263
    %v265 = vrot.slane %v193, %v264
    %v266 = vsel %vm223, %v265, %v261
    %v267 = vlaneseq
    %v268 = vshrl.u32 %v267, 7
    %v269 = vsub.s32 %v225, %v268
    %v270 = vrot.slane %v196, %v269
    %v271 = vsel %vm230, %v270, %v266
    %v272 = vlaneseq
    %v273 = vshrl.u32 %v272, 7
    %v274 = vsub.s32 %v232, %v273
    %v275 = vrot.slane %v199, %v274
    %v276 = vsel %vm237, %v275, %v271
    %v277 = vlaneseq
    %v278 = vshrl.u32 %v277, 7
    %v279 = vsub.s32 %v213, %v278
    %v280 = vrot.slane %v202, %v279
    %v281 = vlaneseq
    %v282 = vshrl.u32 %v281, 7
    %v283 = vsub.s32 %v218, %v282
    %v284 = vrot.slane %v205, %v283
    %v285 = vsel %vm223, %v284, %v280
    %v286 = vlaneseq
    %v287 = vshrl.u32 %v286, 7
    %v288 = vsub.s32 %v225, %v287
    %v289 = vrot.slane %v208, %v288
    %v290 = vsel %vm230, %v289, %v285
    %v291 = vlaneseq
    %v292 = vshrl.u32 %v291, 7
    %v293 = vsub.s32 %v232, %v292
    %v294 = vrot.slane %v211, %v293
    %v295 = vsel %vm237, %v294, %v290
    %vm296 = vcmask 1041409
    %v297 = vsel %vm296, %v257, %v238
    %v298 = vsel %vm296, %v295, %v276
    %vm301 = vcmask 254976
    %v302 = vsel %vm301, %v297, 0.0
    %303 = vadd.xlane.f32.xlu0 %v302
    %v304 = vpop.xlane.xlu0 %303
    %v305 = vsel %vm301, %v298, 0.0
    %306 = vadd.xlane.f32.xlu0 %v305
    %v307 = vpop.xlane.xlu0 %306
    %v308 = vld [vmem:[%s2] sm:$0x1]
    %v310 = vlaneseq
    %v311 = vshrl.u32 %v310, 7
    %v312 = vsub.s32 0, %v311
    %v313 = vrot.slane %v308, %v312
    %315 = vbcast.lane.b32.xlu0 %v313, 256
    %v316 = vpop.permute.xlu0 %315
    %v318 = vadd.f32 %v304, %v316
    %v319 = vadd.f32 %v307, %v316
    %v320 = vmax.f32 %v318, 0.0
    %v321 = vmax.f32 %v319, 0.0
    %v322 = vld [vmem:[%s3] sm:$0xff]
    %v323 = vld [vmem:[%s3 + $0x8] sm:$0xff]
    %v324 = vld [vmem:[%s3 + $0x10] sm:$0xff]
    %v325 = vld [vmem:[%s3 + $0x18] sm:$0xff]
    %v330 = vlaneseq
    %v331 = vshrl.u32 %v330, 7
    %v332 = vsub.s32 0, %v331
    %v333 = vrot.slane %v322, %v332
    %335 = vbcast.lane.b32.xlu0 %v333, 256
    %v336 = vpop.permute.xlu0 %335
    %v337 = vlaneseq
    %v338 = vshrl.u32 %v337, 7
    %v339 = vsub.s32 1, %v338
    %v340 = vrot.slane %v322, %v339
    %342 = vbcast.lane.b32.xlu0 %v340, 256
    %v343 = vpop.permute.xlu0 %342
    %v344 = vlaneseq
    %v345 = vshrl.u32 %v344, 7
    %v346 = vsub.s32 2, %v345
    %v347 = vrot.slane %v322, %v346
    %349 = vbcast.lane.b32.xlu0 %v347, 256
    %v350 = vpop.permute.xlu0 %349
    %v351 = vlaneseq
    %v352 = vshrl.u32 %v351, 7
    %v353 = vsub.s32 3, %v352
    %v354 = vrot.slane %v322, %v353
    %356 = vbcast.lane.b32.xlu0 %v354, 256
    %v357 = vpop.permute.xlu0 %356
    %v358 = vlaneseq
    %v359 = vshrl.u32 %v358, 7
    %v360 = vsub.s32 4, %v359
    %v361 = vrot.slane %v322, %v360
    %363 = vbcast.lane.b32.xlu0 %v361, 256
    %v364 = vpop.permute.xlu0 %363
    %v365 = vlaneseq
    %v366 = vshrl.u32 %v365, 7
    %v367 = vsub.s32 5, %v366
    %v368 = vrot.slane %v322, %v367
    %370 = vbcast.lane.b32.xlu0 %v368, 256
    %v371 = vpop.permute.xlu0 %370
    %v372 = vlaneseq
    %v373 = vshrl.u32 %v372, 7
    %v374 = vsub.s32 6, %v373
    %v375 = vrot.slane %v322, %v374
    %377 = vbcast.lane.b32.xlu0 %v375, 256
    %v378 = vpop.permute.xlu0 %377
    %v379 = vlaneseq
    %v380 = vshrl.u32 %v379, 7
    %v381 = vsub.s32 7, %v380
    %v382 = vrot.slane %v322, %v381
    %384 = vbcast.lane.b32.xlu0 %v382, 256
    %v385 = vpop.permute.xlu0 %384
    %v386 = vlaneseq
    %v387 = vshrl.u32 %v386, 7
    %v388 = vsub.s32 0, %v387
    %v389 = vrot.slane %v323, %v388
    %391 = vbcast.lane.b32.xlu0 %v389, 256
    %v392 = vpop.permute.xlu0 %391
    %v393 = vlaneseq
    %v394 = vshrl.u32 %v393, 7
    %v395 = vsub.s32 1, %v394
    %v396 = vrot.slane %v323, %v395
    %398 = vbcast.lane.b32.xlu0 %v396, 256
    %v399 = vpop.permute.xlu0 %398
    %v400 = vlaneseq
    %v401 = vshrl.u32 %v400, 7
    %v402 = vsub.s32 2, %v401
    %v403 = vrot.slane %v323, %v402
    %405 = vbcast.lane.b32.xlu0 %v403, 256
    %v406 = vpop.permute.xlu0 %405
    %v407 = vlaneseq
    %v408 = vshrl.u32 %v407, 7
    %v409 = vsub.s32 3, %v408
    %v410 = vrot.slane %v323, %v409
    %412 = vbcast.lane.b32.xlu0 %v410, 256
    %v413 = vpop.permute.xlu0 %412
    %v414 = vlaneseq
    %v415 = vshrl.u32 %v414, 7
    %v416 = vsub.s32 4, %v415
    %v417 = vrot.slane %v323, %v416
    %419 = vbcast.lane.b32.xlu0 %v417, 256
    %v420 = vpop.permute.xlu0 %419
    %v421 = vlaneseq
    %v422 = vshrl.u32 %v421, 7
    %v423 = vsub.s32 5, %v422
    %v424 = vrot.slane %v323, %v423
    %426 = vbcast.lane.b32.xlu0 %v424, 256
    %v427 = vpop.permute.xlu0 %426
    %v428 = vlaneseq
    %v429 = vshrl.u32 %v428, 7
    %v430 = vsub.s32 6, %v429
    %v431 = vrot.slane %v323, %v430
    %433 = vbcast.lane.b32.xlu0 %v431, 256
    %v434 = vpop.permute.xlu0 %433
    %v435 = vlaneseq
    %v436 = vshrl.u32 %v435, 7
    %v437 = vsub.s32 7, %v436
    %v438 = vrot.slane %v323, %v437
    %440 = vbcast.lane.b32.xlu0 %v438, 256
    %v441 = vpop.permute.xlu0 %440
    %v442 = vlaneseq
    %v443 = vshrl.u32 %v442, 7
    %v444 = vsub.s32 0, %v443
    %v445 = vrot.slane %v324, %v444
    %447 = vbcast.lane.b32.xlu0 %v445, 256
    %v448 = vpop.permute.xlu0 %447
    %v449 = vlaneseq
    %v450 = vshrl.u32 %v449, 7
    %v451 = vsub.s32 1, %v450
    %v452 = vrot.slane %v324, %v451
    %454 = vbcast.lane.b32.xlu0 %v452, 256
    %v455 = vpop.permute.xlu0 %454
    %v456 = vlaneseq
    %v457 = vshrl.u32 %v456, 7
    %v458 = vsub.s32 2, %v457
    %v459 = vrot.slane %v324, %v458
    %461 = vbcast.lane.b32.xlu0 %v459, 256
    %v462 = vpop.permute.xlu0 %461
    %v463 = vlaneseq
    %v464 = vshrl.u32 %v463, 7
    %v465 = vsub.s32 3, %v464
    %v466 = vrot.slane %v324, %v465
    %468 = vbcast.lane.b32.xlu0 %v466, 256
    %v469 = vpop.permute.xlu0 %468
    %v470 = vlaneseq
    %v471 = vshrl.u32 %v470, 7
    %v472 = vsub.s32 4, %v471
    %v473 = vrot.slane %v324, %v472
    %475 = vbcast.lane.b32.xlu0 %v473, 256
    %v476 = vpop.permute.xlu0 %475
    %v477 = vlaneseq
    %v478 = vshrl.u32 %v477, 7
    %v479 = vsub.s32 5, %v478
    %v480 = vrot.slane %v324, %v479
    %482 = vbcast.lane.b32.xlu0 %v480, 256
    %v483 = vpop.permute.xlu0 %482
    %v484 = vlaneseq
    %v485 = vshrl.u32 %v484, 7
    %v486 = vsub.s32 6, %v485
    %v487 = vrot.slane %v324, %v486
    %489 = vbcast.lane.b32.xlu0 %v487, 256
    %v490 = vpop.permute.xlu0 %489
    %v491 = vlaneseq
    %v492 = vshrl.u32 %v491, 7
    %v493 = vsub.s32 7, %v492
    %v494 = vrot.slane %v324, %v493
    %496 = vbcast.lane.b32.xlu0 %v494, 256
    %v497 = vpop.permute.xlu0 %496
    %v498 = vlaneseq
    %v499 = vshrl.u32 %v498, 7
    %v500 = vsub.s32 0, %v499
    %v501 = vrot.slane %v325, %v500
    %503 = vbcast.lane.b32.xlu0 %v501, 256
    %v504 = vpop.permute.xlu0 %503
    %v505 = vlaneseq
    %v506 = vshrl.u32 %v505, 7
    %v507 = vsub.s32 1, %v506
    %v508 = vrot.slane %v325, %v507
    %510 = vbcast.lane.b32.xlu0 %v508, 256
    %v511 = vpop.permute.xlu0 %510
    %v512 = vlaneseq
    %v513 = vshrl.u32 %v512, 7
    %v514 = vsub.s32 2, %v513
    %v515 = vrot.slane %v325, %v514
    %517 = vbcast.lane.b32.xlu0 %v515, 256
    %v518 = vpop.permute.xlu0 %517
    %v519 = vlaneseq
    %v520 = vshrl.u32 %v519, 7
    %v521 = vsub.s32 3, %v520
    %v522 = vrot.slane %v325, %v521
    %524 = vbcast.lane.b32.xlu0 %v522, 256
    %v525 = vpop.permute.xlu0 %524
    %v526 = vlaneseq
    %v527 = vshrl.u32 %v526, 7
    %v528 = vsub.s32 4, %v527
    %v529 = vrot.slane %v325, %v528
    %531 = vbcast.lane.b32.xlu0 %v529, 256
    %v532 = vpop.permute.xlu0 %531
    %v533 = vlaneseq
    %v534 = vshrl.u32 %v533, 7
    %v535 = vsub.s32 5, %v534
    %v536 = vrot.slane %v325, %v535
    %538 = vbcast.lane.b32.xlu0 %v536, 256
    %v539 = vpop.permute.xlu0 %538
    %v540 = vlaneseq
    %v541 = vshrl.u32 %v540, 7
    %v542 = vsub.s32 6, %v541
    %v543 = vrot.slane %v325, %v542
    %545 = vbcast.lane.b32.xlu0 %v543, 256
    %v546 = vpop.permute.xlu0 %545
    %v547 = vlaneseq
    %v548 = vshrl.u32 %v547, 7
    %v549 = vsub.s32 7, %v548
    %v550 = vrot.slane %v325, %v549
    %552 = vbcast.lane.b32.xlu0 %v550, 256
    %v553 = vpop.permute.xlu0 %552
    %v586 = vmul.f32 %v320, %v336
    %v587 = vmul.f32 %v320, %v343
    %v588 = vmul.f32 %v320, %v350
    %v589 = vmul.f32 %v320, %v357
    %v590 = vmul.f32 %v320, %v364
    %v591 = vmul.f32 %v320, %v371
    %v592 = vmul.f32 %v320, %v378
    %v593 = vmul.f32 %v320, %v385
    %v594 = vmul.f32 %v320, %v392
    %v595 = vmul.f32 %v320, %v399
    %v596 = vmul.f32 %v320, %v406
    %v597 = vmul.f32 %v320, %v413
    %v598 = vmul.f32 %v320, %v420
    %v599 = vmul.f32 %v320, %v427
    %v600 = vmul.f32 %v320, %v434
    %v601 = vmul.f32 %v320, %v441
    %v602 = vmul.f32 %v320, %v448
    %v603 = vmul.f32 %v320, %v455
    %v604 = vmul.f32 %v320, %v462
    %v605 = vmul.f32 %v320, %v469
    %v606 = vmul.f32 %v320, %v476
    %v607 = vmul.f32 %v320, %v483
    %v608 = vmul.f32 %v320, %v490
    %v609 = vmul.f32 %v320, %v497
    %v610 = vmul.f32 %v320, %v504
    %v611 = vmul.f32 %v320, %v511
    %v612 = vmul.f32 %v320, %v518
    %v613 = vmul.f32 %v320, %v525
    %v614 = vmul.f32 %v320, %v532
    %v615 = vmul.f32 %v320, %v539
    %v616 = vmul.f32 %v320, %v546
    %v617 = vmul.f32 %v320, %v553
    %v618 = vmul.f32 %v321, %v336
    %v619 = vmul.f32 %v321, %v343
    %v620 = vmul.f32 %v321, %v350
    %v621 = vmul.f32 %v321, %v357
    %v622 = vmul.f32 %v321, %v364
    %v623 = vmul.f32 %v321, %v371
    %v624 = vmul.f32 %v321, %v378
    %v625 = vmul.f32 %v321, %v385
    %v626 = vmul.f32 %v321, %v392
    %v627 = vmul.f32 %v321, %v399
    %v628 = vmul.f32 %v321, %v406
    %v629 = vmul.f32 %v321, %v413
    %v630 = vmul.f32 %v321, %v420
    %v631 = vmul.f32 %v321, %v427
    %v632 = vmul.f32 %v321, %v434
    %v633 = vmul.f32 %v321, %v441
    %v634 = vmul.f32 %v321, %v448
    %v635 = vmul.f32 %v321, %v455
    %v636 = vmul.f32 %v321, %v462
    %v637 = vmul.f32 %v321, %v469
    %v638 = vmul.f32 %v321, %v476
    %v639 = vmul.f32 %v321, %v483
    %v640 = vmul.f32 %v321, %v490
    %v641 = vmul.f32 %v321, %v497
    %v642 = vmul.f32 %v321, %v504
    %v643 = vmul.f32 %v321, %v511
    %v644 = vmul.f32 %v321, %v518
    %v645 = vmul.f32 %v321, %v525
    %v646 = vmul.f32 %v321, %v532
    %v647 = vmul.f32 %v321, %v539
    %v648 = vmul.f32 %v321, %v546
    %v649 = vmul.f32 %v321, %v553
    %714 = vset.pattern.permute.xlu0 0
    %715 = vperm.xlu0 %714, %v586
    %v716 = vpop.permute.xlu0 %715
    %717 = vset.pattern.permute.xlu0 0
    %718 = vperm.xlu0 %717, %v587
    %v719 = vpop.permute.xlu0 %718
    %720 = vset.pattern.permute.xlu0 0
    %721 = vperm.xlu0 %720, %v588
    %v722 = vpop.permute.xlu0 %721
    %723 = vset.pattern.permute.xlu0 0
    %724 = vperm.xlu0 %723, %v589
    %v725 = vpop.permute.xlu0 %724
    %726 = vset.pattern.permute.xlu0 0
    %727 = vperm.xlu0 %726, %v590
    %v728 = vpop.permute.xlu0 %727
    %729 = vset.pattern.permute.xlu0 0
    %730 = vperm.xlu0 %729, %v591
    %v731 = vpop.permute.xlu0 %730
    %732 = vset.pattern.permute.xlu0 0
    %733 = vperm.xlu0 %732, %v592
    %v734 = vpop.permute.xlu0 %733
    %735 = vset.pattern.permute.xlu0 0
    %736 = vperm.xlu0 %735, %v593
    %v737 = vpop.permute.xlu0 %736
    %738 = vset.pattern.permute.xlu0 0
    %739 = vperm.xlu0 %738, %v594
    %v740 = vpop.permute.xlu0 %739
    %741 = vset.pattern.permute.xlu0 0
    %742 = vperm.xlu0 %741, %v595
    %v743 = vpop.permute.xlu0 %742
    %744 = vset.pattern.permute.xlu0 0
    %745 = vperm.xlu0 %744, %v596
    %v746 = vpop.permute.xlu0 %745
    %747 = vset.pattern.permute.xlu0 0
    %748 = vperm.xlu0 %747, %v597
    %v749 = vpop.permute.xlu0 %748
    %750 = vset.pattern.permute.xlu0 0
    %751 = vperm.xlu0 %750, %v598
    %v752 = vpop.permute.xlu0 %751
    %753 = vset.pattern.permute.xlu0 0
    %754 = vperm.xlu0 %753, %v599
    %v755 = vpop.permute.xlu0 %754
    %756 = vset.pattern.permute.xlu0 0
    %757 = vperm.xlu0 %756, %v600
    %v758 = vpop.permute.xlu0 %757
    %759 = vset.pattern.permute.xlu0 0
    %760 = vperm.xlu0 %759, %v601
    %v761 = vpop.permute.xlu0 %760
    %762 = vset.pattern.permute.xlu0 0
    %763 = vperm.xlu0 %762, %v602
    %v764 = vpop.permute.xlu0 %763
    %765 = vset.pattern.permute.xlu0 0
    %766 = vperm.xlu0 %765, %v603
    %v767 = vpop.permute.xlu0 %766
    %768 = vset.pattern.permute.xlu0 0
    %769 = vperm.xlu0 %768, %v604
    %v770 = vpop.permute.xlu0 %769
    %771 = vset.pattern.permute.xlu0 0
    %772 = vperm.xlu0 %771, %v605
    %v773 = vpop.permute.xlu0 %772
    %774 = vset.pattern.permute.xlu0 0
    %775 = vperm.xlu0 %774, %v606
    %v776 = vpop.permute.xlu0 %775
    %777 = vset.pattern.permute.xlu0 0
    %778 = vperm.xlu0 %777, %v607
    %v779 = vpop.permute.xlu0 %778
    %780 = vset.pattern.permute.xlu0 0
    %781 = vperm.xlu0 %780, %v608
    %v782 = vpop.permute.xlu0 %781
    %783 = vset.pattern.permute.xlu0 0
    %784 = vperm.xlu0 %783, %v609
    %v785 = vpop.permute.xlu0 %784
    %786 = vset.pattern.permute.xlu0 0
    %787 = vperm.xlu0 %786, %v610
    %v788 = vpop.permute.xlu0 %787
    %789 = vset.pattern.permute.xlu0 0
    %790 = vperm.xlu0 %789, %v611
    %v791 = vpop.permute.xlu0 %790
    %792 = vset.pattern.permute.xlu0 0
    %793 = vperm.xlu0 %792, %v612
    %v794 = vpop.permute.xlu0 %793
    %795 = vset.pattern.permute.xlu0 0
    %796 = vperm.xlu0 %795, %v613
    %v797 = vpop.permute.xlu0 %796
    %798 = vset.pattern.permute.xlu0 0
    %799 = vperm.xlu0 %798, %v614
    %v800 = vpop.permute.xlu0 %799
    %801 = vset.pattern.permute.xlu0 0
    %802 = vperm.xlu0 %801, %v615
    %v803 = vpop.permute.xlu0 %802
    %804 = vset.pattern.permute.xlu0 0
    %805 = vperm.xlu0 %804, %v616
    %v806 = vpop.permute.xlu0 %805
    %807 = vset.pattern.permute.xlu0 0
    %808 = vperm.xlu0 %807, %v617
    %v809 = vpop.permute.xlu0 %808
    %810 = vset.pattern.permute.xlu0 0
    %811 = vperm.xlu0 %810, %v618
    %v812 = vpop.permute.xlu0 %811
    %813 = vset.pattern.permute.xlu0 0
    %814 = vperm.xlu0 %813, %v619
    %v815 = vpop.permute.xlu0 %814
    %816 = vset.pattern.permute.xlu0 0
    %817 = vperm.xlu0 %816, %v620
    %v818 = vpop.permute.xlu0 %817
    %819 = vset.pattern.permute.xlu0 0
    %820 = vperm.xlu0 %819, %v621
    %v821 = vpop.permute.xlu0 %820
    %822 = vset.pattern.permute.xlu0 0
    %823 = vperm.xlu0 %822, %v622
    %v824 = vpop.permute.xlu0 %823
    %825 = vset.pattern.permute.xlu0 0
    %826 = vperm.xlu0 %825, %v623
    %v827 = vpop.permute.xlu0 %826
    %828 = vset.pattern.permute.xlu0 0
    %829 = vperm.xlu0 %828, %v624
    %v830 = vpop.permute.xlu0 %829
    %831 = vset.pattern.permute.xlu0 0
    %832 = vperm.xlu0 %831, %v625
    %v833 = vpop.permute.xlu0 %832
    %834 = vset.pattern.permute.xlu0 0
    %835 = vperm.xlu0 %834, %v626
    %v836 = vpop.permute.xlu0 %835
    %837 = vset.pattern.permute.xlu0 0
    %838 = vperm.xlu0 %837, %v627
    %v839 = vpop.permute.xlu0 %838
    %840 = vset.pattern.permute.xlu0 0
    %841 = vperm.xlu0 %840, %v628
    %v842 = vpop.permute.xlu0 %841
    %843 = vset.pattern.permute.xlu0 0
    %844 = vperm.xlu0 %843, %v629
    %v845 = vpop.permute.xlu0 %844
    %846 = vset.pattern.permute.xlu0 0
    %847 = vperm.xlu0 %846, %v630
    %v848 = vpop.permute.xlu0 %847
    %849 = vset.pattern.permute.xlu0 0
    %850 = vperm.xlu0 %849, %v631
    %v851 = vpop.permute.xlu0 %850
    %852 = vset.pattern.permute.xlu0 0
    %853 = vperm.xlu0 %852, %v632
    %v854 = vpop.permute.xlu0 %853
    %855 = vset.pattern.permute.xlu0 0
    %856 = vperm.xlu0 %855, %v633
    %v857 = vpop.permute.xlu0 %856
    %858 = vset.pattern.permute.xlu0 0
    %859 = vperm.xlu0 %858, %v634
    %v860 = vpop.permute.xlu0 %859
    %861 = vset.pattern.permute.xlu0 0
    %862 = vperm.xlu0 %861, %v635
    %v863 = vpop.permute.xlu0 %862
    %864 = vset.pattern.permute.xlu0 0
    %865 = vperm.xlu0 %864, %v636
    %v866 = vpop.permute.xlu0 %865
    %867 = vset.pattern.permute.xlu0 0
    %868 = vperm.xlu0 %867, %v637
    %v869 = vpop.permute.xlu0 %868
    %870 = vset.pattern.permute.xlu0 0
    %871 = vperm.xlu0 %870, %v638
    %v872 = vpop.permute.xlu0 %871
    %873 = vset.pattern.permute.xlu0 0
    %874 = vperm.xlu0 %873, %v639
    %v875 = vpop.permute.xlu0 %874
    %876 = vset.pattern.permute.xlu0 0
    %877 = vperm.xlu0 %876, %v640
    %v878 = vpop.permute.xlu0 %877
    %879 = vset.pattern.permute.xlu0 0
    %880 = vperm.xlu0 %879, %v641
    %v881 = vpop.permute.xlu0 %880
    %882 = vset.pattern.permute.xlu0 0
    %883 = vperm.xlu0 %882, %v642
    %v884 = vpop.permute.xlu0 %883
    %885 = vset.pattern.permute.xlu0 0
    %886 = vperm.xlu0 %885, %v643
    %v887 = vpop.permute.xlu0 %886
    %888 = vset.pattern.permute.xlu0 0
    %889 = vperm.xlu0 %888, %v644
    %v890 = vpop.permute.xlu0 %889
    %891 = vset.pattern.permute.xlu0 0
    %892 = vperm.xlu0 %891, %v645
    %v893 = vpop.permute.xlu0 %892
    %894 = vset.pattern.permute.xlu0 0
    %895 = vperm.xlu0 %894, %v646
    %v896 = vpop.permute.xlu0 %895
    %897 = vset.pattern.permute.xlu0 0
    %898 = vperm.xlu0 %897, %v647
    %v899 = vpop.permute.xlu0 %898
    %900 = vset.pattern.permute.xlu0 0
    %901 = vperm.xlu0 %900, %v648
    %v902 = vpop.permute.xlu0 %901
    %903 = vset.pattern.permute.xlu0 0
    %904 = vperm.xlu0 %903, %v649
    %v905 = vpop.permute.xlu0 %904
    %v906 = vlaneseq
    %v907 = vshrl.u32 %v906, 7
    %v908 = vsub.s32 %v213, %v907
    %v909 = vrot.slane %v716, %v908
    %v910 = vlaneseq
    %v911 = vshrl.u32 %v910, 7
    %v912 = vsub.s32 %v213, %v911
    %v913 = vrot.slane %v719, %v912
    %v914 = vlaneseq
    %v915 = vshrl.u32 %v914, 7
    %v916 = vsub.s32 %v213, %v915
    %v917 = vrot.slane %v722, %v916
    %v918 = vlaneseq
    %v919 = vshrl.u32 %v918, 7
    %v920 = vsub.s32 %v213, %v919
    %v921 = vrot.slane %v725, %v920
    %v922 = vlaneseq
    %v923 = vshrl.u32 %v922, 7
    %v924 = vsub.s32 %v213, %v923
    %v925 = vrot.slane %v728, %v924
    %v926 = vlaneseq
    %v927 = vshrl.u32 %v926, 7
    %v928 = vsub.s32 %v213, %v927
    %v929 = vrot.slane %v731, %v928
    %v930 = vlaneseq
    %v931 = vshrl.u32 %v930, 7
    %v932 = vsub.s32 %v213, %v931
    %v933 = vrot.slane %v734, %v932
    %v934 = vlaneseq
    %v935 = vshrl.u32 %v934, 7
    %v936 = vsub.s32 %v213, %v935
    %v937 = vrot.slane %v737, %v936
    %v938 = vlaneseq
    %v939 = vshrl.u32 %v938, 7
    %v940 = vsub.s32 %v213, %v939
    %v941 = vrot.slane %v740, %v940
    %v942 = vlaneseq
    %v943 = vshrl.u32 %v942, 7
    %v944 = vsub.s32 %v213, %v943
    %v945 = vrot.slane %v743, %v944
    %v946 = vlaneseq
    %v947 = vshrl.u32 %v946, 7
    %v948 = vsub.s32 %v213, %v947
    %v949 = vrot.slane %v746, %v948
    %v950 = vlaneseq
    %v951 = vshrl.u32 %v950, 7
    %v952 = vsub.s32 %v213, %v951
    %v953 = vrot.slane %v749, %v952
    %v954 = vlaneseq
    %v955 = vshrl.u32 %v954, 7
    %v956 = vsub.s32 %v213, %v955
    %v957 = vrot.slane %v752, %v956
    %v958 = vlaneseq
    %v959 = vshrl.u32 %v958, 7
    %v960 = vsub.s32 %v213, %v959
    %v961 = vrot.slane %v755, %v960
    %v962 = vlaneseq
    %v963 = vshrl.u32 %v962, 7
    %v964 = vsub.s32 %v213, %v963
    %v965 = vrot.slane %v758, %v964
    %v966 = vlaneseq
    %v967 = vshrl.u32 %v966, 7
    %v968 = vsub.s32 %v213, %v967
    %v969 = vrot.slane %v761, %v968
    %v970 = vlaneseq
    %v971 = vshrl.u32 %v970, 7
    %v972 = vsub.s32 %v213, %v971
    %v973 = vrot.slane %v764, %v972
    %v974 = vlaneseq
    %v975 = vshrl.u32 %v974, 7
    %v976 = vsub.s32 %v213, %v975
    %v977 = vrot.slane %v767, %v976
    %v978 = vlaneseq
    %v979 = vshrl.u32 %v978, 7
    %v980 = vsub.s32 %v213, %v979
    %v981 = vrot.slane %v770, %v980
    %v982 = vlaneseq
    %v983 = vshrl.u32 %v982, 7
    %v984 = vsub.s32 %v213, %v983
    %v985 = vrot.slane %v773, %v984
    %v986 = vlaneseq
    %v987 = vshrl.u32 %v986, 7
    %v988 = vsub.s32 %v213, %v987
    %v989 = vrot.slane %v776, %v988
    %v990 = vlaneseq
    %v991 = vshrl.u32 %v990, 7
    %v992 = vsub.s32 %v213, %v991
    %v993 = vrot.slane %v779, %v992
    %v994 = vlaneseq
    %v995 = vshrl.u32 %v994, 7
    %v996 = vsub.s32 %v213, %v995
    %v997 = vrot.slane %v782, %v996
    %v998 = vlaneseq
    %v999 = vshrl.u32 %v998, 7
    %v1000 = vsub.s32 %v213, %v999
    %v1001 = vrot.slane %v785, %v1000
    %v1002 = vlaneseq
    %v1003 = vshrl.u32 %v1002, 7
    %v1004 = vsub.s32 %v213, %v1003
    %v1005 = vrot.slane %v788, %v1004
    %v1006 = vlaneseq
    %v1007 = vshrl.u32 %v1006, 7
    %v1008 = vsub.s32 %v213, %v1007
    %v1009 = vrot.slane %v791, %v1008
    %v1010 = vlaneseq
    %v1011 = vshrl.u32 %v1010, 7
    %v1012 = vsub.s32 %v213, %v1011
    %v1013 = vrot.slane %v794, %v1012
    %v1014 = vlaneseq
    %v1015 = vshrl.u32 %v1014, 7
    %v1016 = vsub.s32 %v213, %v1015
    %v1017 = vrot.slane %v797, %v1016
    %v1018 = vlaneseq
    %v1019 = vshrl.u32 %v1018, 7
    %v1020 = vsub.s32 %v213, %v1019
    %v1021 = vrot.slane %v800, %v1020
    %v1022 = vlaneseq
    %v1023 = vshrl.u32 %v1022, 7
    %v1024 = vsub.s32 %v213, %v1023
    %v1025 = vrot.slane %v803, %v1024
    %v1026 = vlaneseq
    %v1027 = vshrl.u32 %v1026, 7
    %v1028 = vsub.s32 %v213, %v1027
    %v1029 = vrot.slane %v806, %v1028
    %v1030 = vlaneseq
    %v1031 = vshrl.u32 %v1030, 7
    %v1032 = vsub.s32 %v213, %v1031
    %v1033 = vrot.slane %v809, %v1032
    %v1034 = vlaneseq
    %v1035 = vshrl.u32 %v1034, 7
    %v1036 = vsub.s32 %v213, %v1035
    %v1037 = vrot.slane %v812, %v1036
    %v1038 = vlaneseq
    %v1039 = vshrl.u32 %v1038, 7
    %v1040 = vsub.s32 %v213, %v1039
    %v1041 = vrot.slane %v815, %v1040
    %v1042 = vlaneseq
    %v1043 = vshrl.u32 %v1042, 7
    %v1044 = vsub.s32 %v213, %v1043
    %v1045 = vrot.slane %v818, %v1044
    %v1046 = vlaneseq
    %v1047 = vshrl.u32 %v1046, 7
    %v1048 = vsub.s32 %v213, %v1047
    %v1049 = vrot.slane %v821, %v1048
    %v1050 = vlaneseq
    %v1051 = vshrl.u32 %v1050, 7
    %v1052 = vsub.s32 %v213, %v1051
    %v1053 = vrot.slane %v824, %v1052
    %v1054 = vlaneseq
    %v1055 = vshrl.u32 %v1054, 7
    %v1056 = vsub.s32 %v213, %v1055
    %v1057 = vrot.slane %v827, %v1056
    %v1058 = vlaneseq
    %v1059 = vshrl.u32 %v1058, 7
    %v1060 = vsub.s32 %v213, %v1059
    %v1061 = vrot.slane %v830, %v1060
    %v1062 = vlaneseq
    %v1063 = vshrl.u32 %v1062, 7
    %v1064 = vsub.s32 %v213, %v1063
    %v1065 = vrot.slane %v833, %v1064
    %v1066 = vlaneseq
    %v1067 = vshrl.u32 %v1066, 7
    %v1068 = vsub.s32 %v213, %v1067
    %v1069 = vrot.slane %v836, %v1068
    %v1070 = vlaneseq
    %v1071 = vshrl.u32 %v1070, 7
    %v1072 = vsub.s32 %v213, %v1071
    %v1073 = vrot.slane %v839, %v1072
    %v1074 = vlaneseq
    %v1075 = vshrl.u32 %v1074, 7
    %v1076 = vsub.s32 %v213, %v1075
    %v1077 = vrot.slane %v842, %v1076
    %v1078 = vlaneseq
    %v1079 = vshrl.u32 %v1078, 7
    %v1080 = vsub.s32 %v213, %v1079
    %v1081 = vrot.slane %v845, %v1080
    %v1082 = vlaneseq
    %v1083 = vshrl.u32 %v1082, 7
    %v1084 = vsub.s32 %v213, %v1083
    %v1085 = vrot.slane %v848, %v1084
    %v1086 = vlaneseq
    %v1087 = vshrl.u32 %v1086, 7
    %v1088 = vsub.s32 %v213, %v1087
    %v1089 = vrot.slane %v851, %v1088
    %v1090 = vlaneseq
    %v1091 = vshrl.u32 %v1090, 7
    %v1092 = vsub.s32 %v213, %v1091
    %v1093 = vrot.slane %v854, %v1092
    %v1094 = vlaneseq
    %v1095 = vshrl.u32 %v1094, 7
    %v1096 = vsub.s32 %v213, %v1095
    %v1097 = vrot.slane %v857, %v1096
    %v1098 = vlaneseq
    %v1099 = vshrl.u32 %v1098, 7
    %v1100 = vsub.s32 %v213, %v1099
    %v1101 = vrot.slane %v860, %v1100
    %v1102 = vlaneseq
    %v1103 = vshrl.u32 %v1102, 7
    %v1104 = vsub.s32 %v213, %v1103
    %v1105 = vrot.slane %v863, %v1104
    %v1106 = vlaneseq
    %v1107 = vshrl.u32 %v1106, 7
    %v1108 = vsub.s32 %v213, %v1107
    %v1109 = vrot.slane %v866, %v1108
    %v1110 = vlaneseq
    %v1111 = vshrl.u32 %v1110, 7
    %v1112 = vsub.s32 %v213, %v1111
    %v1113 = vrot.slane %v869, %v1112
    %v1114 = vlaneseq
    %v1115 = vshrl.u32 %v1114, 7
    %v1116 = vsub.s32 %v213, %v1115
    %v1117 = vrot.slane %v872, %v1116
    %v1118 = vlaneseq
    %v1119 = vshrl.u32 %v1118, 7
    %v1120 = vsub.s32 %v213, %v1119
    %v1121 = vrot.slane %v875, %v1120
    %v1122 = vlaneseq
    %v1123 = vshrl.u32 %v1122, 7
    %v1124 = vsub.s32 %v213, %v1123
    %v1125 = vrot.slane %v878, %v1124
    %v1126 = vlaneseq
    %v1127 = vshrl.u32 %v1126, 7
    %v1128 = vsub.s32 %v213, %v1127
    %v1129 = vrot.slane %v881, %v1128
    %v1130 = vlaneseq
    %v1131 = vshrl.u32 %v1130, 7
    %v1132 = vsub.s32 %v213, %v1131
    %v1133 = vrot.slane %v884, %v1132
    %v1134 = vlaneseq
    %v1135 = vshrl.u32 %v1134, 7
    %v1136 = vsub.s32 %v213, %v1135
    %v1137 = vrot.slane %v887, %v1136
    %v1138 = vlaneseq
    %v1139 = vshrl.u32 %v1138, 7
    %v1140 = vsub.s32 %v213, %v1139
    %v1141 = vrot.slane %v890, %v1140
    %v1142 = vlaneseq
    %v1143 = vshrl.u32 %v1142, 7
    %v1144 = vsub.s32 %v213, %v1143
    %v1145 = vrot.slane %v893, %v1144
    %v1146 = vlaneseq
    %v1147 = vshrl.u32 %v1146, 7
    %v1148 = vsub.s32 %v213, %v1147
    %v1149 = vrot.slane %v896, %v1148
    %v1150 = vlaneseq
    %v1151 = vshrl.u32 %v1150, 7
    %v1152 = vsub.s32 %v213, %v1151
    %v1153 = vrot.slane %v899, %v1152
    %v1154 = vlaneseq
    %v1155 = vshrl.u32 %v1154, 7
    %v1156 = vsub.s32 %v213, %v1155
    %v1157 = vrot.slane %v902, %v1156
    %v1158 = vlaneseq
    %v1159 = vshrl.u32 %v1158, 7
    %v1160 = vsub.s32 %v213, %v1159
    %v1161 = vrot.slane %v905, %v1160
    %v1162 = vsel %vm296, %v913, %v909
    %vm1163 = vcmask 1042434
    %v1164 = vsel %vm1163, %v917, %v1162
    %vm1165 = vcmask 1043459
    %v1166 = vsel %vm1165, %v921, %v1164
    %vm1167 = vcmask 1044484
    %v1168 = vsel %vm1167, %v925, %v1166
    %vm1169 = vcmask 1045509
    %v1170 = vsel %vm1169, %v929, %v1168
    %vm1171 = vcmask 1046534
    %v1172 = vsel %vm1171, %v933, %v1170
    %vm1173 = vcmask 1047559
    %v1174 = vsel %vm1173, %v937, %v1172
    %v1175 = vsel %vm296, %v945, %v941
    %v1176 = vsel %vm1163, %v949, %v1175
    %v1177 = vsel %vm1165, %v953, %v1176
    %v1178 = vsel %vm1167, %v957, %v1177
    %v1179 = vsel %vm1169, %v961, %v1178
    %v1180 = vsel %vm1171, %v965, %v1179
    %v1181 = vsel %vm1173, %v969, %v1180
    %v1182 = vsel %vm296, %v977, %v973
    %v1183 = vsel %vm1163, %v981, %v1182
    %v1184 = vsel %vm1165, %v985, %v1183
    %v1185 = vsel %vm1167, %v989, %v1184
    %v1186 = vsel %vm1169, %v993, %v1185
    %v1187 = vsel %vm1171, %v997, %v1186
    %v1188 = vsel %vm1173, %v1001, %v1187
    %v1189 = vsel %vm296, %v1009, %v1005
    %v1190 = vsel %vm1163, %v1013, %v1189
    %v1191 = vsel %vm1165, %v1017, %v1190
    %v1192 = vsel %vm1167, %v1021, %v1191
    %v1193 = vsel %vm1169, %v1025, %v1192
    %v1194 = vsel %vm1171, %v1029, %v1193
    %v1195 = vsel %vm1173, %v1033, %v1194
    %v1196 = vsel %vm296, %v1041, %v1037
    %v1197 = vsel %vm1163, %v1045, %v1196
    %v1198 = vsel %vm1165, %v1049, %v1197
    %v1199 = vsel %vm1167, %v1053, %v1198
    %v1200 = vsel %vm1169, %v1057, %v1199
    %v1201 = vsel %vm1171, %v1061, %v1200
    %v1202 = vsel %vm1173, %v1065, %v1201
    %v1203 = vsel %vm296, %v1073, %v1069
    %v1204 = vsel %vm1163, %v1077, %v1203
    %v1205 = vsel %vm1165, %v1081, %v1204
    %v1206 = vsel %vm1167, %v1085, %v1205
    %v1207 = vsel %vm1169, %v1089, %v1206
    %v1208 = vsel %vm1171, %v1093, %v1207
    %v1209 = vsel %vm1173, %v1097, %v1208
    %v1210 = vsel %vm296, %v1105, %v1101
    %v1211 = vsel %vm1163, %v1109, %v1210
    %v1212 = vsel %vm1165, %v1113, %v1211
    %v1213 = vsel %vm1167, %v1117, %v1212
    %v1214 = vsel %vm1169, %v1121, %v1213
    %v1215 = vsel %vm1171, %v1125, %v1214
    %v1216 = vsel %vm1173, %v1129, %v1215
    %v1217 = vsel %vm296, %v1137, %v1133
    %v1218 = vsel %vm1163, %v1141, %v1217
    %v1219 = vsel %vm1165, %v1145, %v1218
    %v1220 = vsel %vm1167, %v1149, %v1219
    %v1221 = vsel %vm1169, %v1153, %v1220
    %v1222 = vsel %vm1171, %v1157, %v1221
    %v1223 = vsel %vm1173, %v1161, %v1222
    %vm1232 = vcmask 15360
    %v1233 = vsel %vm1232, %v1174, 0.0
    %1234 = vadd.xlane.f32.xlu0 %v1233
    %v1235 = vpop.xlane.xlu0 %1234
    %v1236 = vsel %vm1232, %v1181, 0.0
    %1237 = vadd.xlane.f32.xlu0 %v1236
    %v1238 = vpop.xlane.xlu0 %1237
    %v1239 = vsel %vm1232, %v1188, 0.0
    %1240 = vadd.xlane.f32.xlu0 %v1239
    %v1241 = vpop.xlane.xlu0 %1240
    %v1242 = vsel %vm1232, %v1195, 0.0
    %1243 = vadd.xlane.f32.xlu0 %v1242
    %v1244 = vpop.xlane.xlu0 %1243
    %v1245 = vsel %vm1232, %v1202, 0.0
    %1246 = vadd.xlane.f32.xlu0 %v1245
    %v1247 = vpop.xlane.xlu0 %1246
    %v1248 = vsel %vm1232, %v1209, 0.0
    %1249 = vadd.xlane.f32.xlu0 %v1248
    %v1250 = vpop.xlane.xlu0 %1249
    %v1251 = vsel %vm1232, %v1216, 0.0
    %1252 = vadd.xlane.f32.xlu0 %v1251
    %v1253 = vpop.xlane.xlu0 %1252
    %v1254 = vsel %vm1232, %v1223, 0.0
    %1255 = vadd.xlane.f32.xlu0 %v1254
    %v1256 = vpop.xlane.xlu0 %1255
    %v1257 = vld [vmem:[%s4] sm:$0x1]
    %v1259 = vlaneseq
    %v1260 = vshrl.u32 %v1259, 7
    %v1261 = vsub.s32 0, %v1260
    %v1262 = vrot.slane %v1257, %v1261
    %1264 = vbcast.lane.b32.xlu0 %v1262, 256
    %v1265 = vpop.permute.xlu0 %1264
    %s1267 = sor.u32 256, 8
    %1268 = vbcast.lane.b32.xlu0 %v1262, %s1267
    %v1269 = vpop.permute.xlu0 %1268
    %s1271 = sor.u32 256, 16
    %1272 = vbcast.lane.b32.xlu0 %v1262, %s1271
    %v1273 = vpop.permute.xlu0 %1272
    %s1275 = sor.u32 256, 24
    %1276 = vbcast.lane.b32.xlu0 %v1262, %s1275
    %v1277 = vpop.permute.xlu0 %1276
    %v1282 = vadd.f32 %v1235, %v1265
    %v1283 = vadd.f32 %v1238, %v1269
    %v1284 = vadd.f32 %v1241, %v1273
    %v1285 = vadd.f32 %v1244, %v1277
    %v1286 = vadd.f32 %v1247, %v1265
    %v1287 = vadd.f32 %v1250, %v1269
    %v1288 = vadd.f32 %v1253, %v1273
    %v1289 = vadd.f32 %v1256, %v1277
    %v1290 = vxor.u32 %v1282, 2147483648
    %v1291 = vxor.u32 %v1283, 2147483648
    %v1292 = vxor.u32 %v1284, 2147483648
    %v1293 = vxor.u32 %v1285, 2147483648
    %v1294 = vxor.u32 %v1286, 2147483648
    %v1295 = vxor.u32 %v1287, 2147483648
    %v1296 = vxor.u32 %v1288, 2147483648
    %v1297 = vxor.u32 %v1289, 2147483648
    %v1298 = vmul.f32 %v1290, 1.442695
    %v1299 = vpow.pop %v1298
    %v1300 = vmul.f32 %v1291, 1.442695
    %v1301 = vpow.pop %v1300
    %v1302 = vmul.f32 %v1292, 1.442695
    %v1303 = vpow.pop %v1302
    %v1304 = vmul.f32 %v1293, 1.442695
    %v1305 = vpow.pop %v1304
    %v1306 = vmul.f32 %v1294, 1.442695
    %v1307 = vpow.pop %v1306
    %v1308 = vmul.f32 %v1295, 1.442695
    %v1309 = vpow.pop %v1308
    %v1310 = vmul.f32 %v1296, 1.442695
    %v1311 = vpow.pop %v1310
    %v1312 = vmul.f32 %v1297, 1.442695
    %v1313 = vpow.pop %v1312
    %v1314 = vadd.f32 %v1299, 1.0
    %v1315 = vadd.f32 %v1301, 1.0
    %v1316 = vadd.f32 %v1303, 1.0
    %v1317 = vadd.f32 %v1305, 1.0
    %v1318 = vadd.f32 %v1307, 1.0
    %v1319 = vadd.f32 %v1309, 1.0
    %v1320 = vadd.f32 %v1311, 1.0
    %v1321 = vadd.f32 %v1313, 1.0
    %v1322 = vrcp.pop %v1314
    %v1323 = vmul.f32 1.0, %v1322
    %v1324 = vrcp.pop %v1315
    %v1325 = vmul.f32 1.0, %v1324
    %v1326 = vrcp.pop %v1316
    %v1327 = vmul.f32 1.0, %v1326
    %v1328 = vrcp.pop %v1317
    %v1329 = vmul.f32 1.0, %v1328
    %v1330 = vrcp.pop %v1318
    %v1331 = vmul.f32 1.0, %v1330
    %v1332 = vrcp.pop %v1319
    %v1333 = vmul.f32 1.0, %v1332
    %v1334 = vrcp.pop %v1320
    %v1335 = vmul.f32 1.0, %v1334
    %v1336 = vrcp.pop %v1321
    %v1337 = vmul.f32 1.0, %v1336
    %1339 = vset.pattern.permute.xlu0 0
    %1340 = vperm.xlu0 %1339, %v1323
    %v1341 = vpop.permute.xlu0 %1340
    %1344 = vset.pattern.permute.xlu0 0
    %1345 = vperm.xlu0 %1344, %v1325
    %v1346 = vpop.permute.xlu0 %1345
    %1349 = vset.pattern.permute.xlu0 0
    %1350 = vperm.xlu0 %1349, %v1327
    %v1351 = vpop.permute.xlu0 %1350
    %1354 = vset.pattern.permute.xlu0 0
    %1355 = vperm.xlu0 %1354, %v1329
    %v1356 = vpop.permute.xlu0 %1355
    %1359 = vset.pattern.permute.xlu0 0
    %1360 = vperm.xlu0 %1359, %v1331
    %v1361 = vpop.permute.xlu0 %1360
    %1364 = vset.pattern.permute.xlu0 0
    %1365 = vperm.xlu0 %1364, %v1333
    %v1366 = vpop.permute.xlu0 %1365
    %1369 = vset.pattern.permute.xlu0 0
    %1370 = vperm.xlu0 %1369, %v1335
    %v1371 = vpop.permute.xlu0 %1370
    %1374 = vset.pattern.permute.xlu0 0
    %1375 = vperm.xlu0 %1374, %v1337
    %v1376 = vpop.permute.xlu0 %1375
    %v1378 = vmul.f32 %v35, %v1341
    %v1379 = vmul.f32 %v36, %v1341
    %v1380 = vmul.f32 %v37, %v1346
    %v1381 = vmul.f32 %v38, %v1346
    %v1382 = vmul.f32 %v39, %v1351
    %v1383 = vmul.f32 %v40, %v1351
    %v1384 = vmul.f32 %v41, %v1356
    %v1385 = vmul.f32 %v42, %v1356
    %v1386 = vmul.f32 %v43, %v1361
    %v1387 = vmul.f32 %v44, %v1361
    %v1388 = vmul.f32 %v45, %v1366
    %v1389 = vmul.f32 %v46, %v1366
    %v1390 = vmul.f32 %v47, %v1371
    %v1391 = vmul.f32 %v48, %v1371
    %v1392 = vmul.f32 %v49, %v1376
    %v1393 = vmul.f32 %v50, %v1376
    %1394 = vst [vmem:[#allocation5] sm:$0xff] %v1378
    %1395 = vst [vmem:[#allocation5 + $0x8] sm:$0xff] %v1379
    %1396 = vst [vmem:[#allocation5 + $0x10] sm:$0xff] %v1380
    %1397 = vst [vmem:[#allocation5 + $0x18] sm:$0xff] %v1381
    %1398 = vst [vmem:[#allocation5 + $0x20] sm:$0xff] %v1382
    %1399 = vst [vmem:[#allocation5 + $0x28] sm:$0xff] %v1383
    %1400 = vst [vmem:[#allocation5 + $0x30] sm:$0xff] %v1384
    %1401 = vst [vmem:[#allocation5 + $0x38] sm:$0xff] %v1385
    %1402 = vst [vmem:[#allocation5 + $0x40] sm:$0xff] %v1386
    %1403 = vst [vmem:[#allocation5 + $0x48] sm:$0xff] %v1387
    %1404 = vst [vmem:[#allocation5 + $0x50] sm:$0xff] %v1388
    %1405 = vst [vmem:[#allocation5 + $0x58] sm:$0xff] %v1389
    %1406 = vst [vmem:[#allocation5 + $0x60] sm:$0xff] %v1390
    %1407 = vst [vmem:[#allocation5 + $0x68] sm:$0xff] %v1391
    %1408 = vst [vmem:[#allocation5 + $0x70] sm:$0xff] %v1392
    %1409 = vst [vmem:[#allocation5 + $0x78] sm:$0xff] %v1393
    // Predicated region
    $region26: #{tpu_custom_call.1} parent=1 // pred_check
      _
    $region27: #{tpu_custom_call.1} parent=1 // pred_check_branch
      %1411 = sbr.rel (0) target = $region29
    $region28: #{tpu_custom_call.1} parent=1 // pred_region
      %s1413 = ssub.s32 2048, 2048
      %1414 = vsyncadd [#allocation4], %s1413
      %s1415 = sshll.u32 [#allocation5], 4
      %s1416 = int_to_ptr.vmem [resolvable:$true] %s1415
      %1421 = dma.vmem_to_hbm [thread:$0]  %s1416, 2048, %s5, [#allocation4], 256, 256, 16
    $region29: #{tpu_custom_call.1} parent=1 // pred_fallthru
      _
    // Predicated region
    $region30: #{tpu_custom_call.1} parent=1 // pred_check
      _
    $region31: #{tpu_custom_call.1} parent=1 // pred_check_branch
      %1423 = sbr.rel (0) target = $region33
    $region32: #{tpu_custom_call.1} parent=1 // pred_region
      %1424 = dma.done [#allocation4], 2048
    $region33: #{tpu_custom_call.1} parent=1 // pred_fallthru
      _
    %1425 = vsyncpa [#allocation3], 1
    %1426 = vsyncpa [#allocation4], 1

</llo_original>
